<compile_context>
chip_gen: v5e
topology: v5e:2x2
jax: 0.10.0
libtpu: 0.0.40
codegen_flags: <defaults>
</compile_context>

<pallas_src>
import jax
import jax.numpy as jnp
from jax.experimental import pallas as pl
from jax.experimental.pallas import tpu as pltpu


def mlp_kernel(x_ref, w1_ref, b1_ref, w2_ref, b2_ref, w3d_ref, b3d_ref, o_ref):
    x = x_ref[...]                                                  # (TILE_B, 102) bf16

    # Layer 1: Linear(102, 64) + ReLU  (bf16 MXU operands, f32 accumulation)
    h1 = jnp.dot(x, w1_ref[...], preferred_element_type=jnp.float32)
    h1 = jnp.maximum(h1 + b1_ref[...], 0.0)                         # (TILE_B, 64) f32

    # Layer 2: Linear(64, 32) + ReLU   (bf16 operands -> single-pass MXU)
    h2 = jnp.dot(h1.astype(jnp.bfloat16), w2_ref[...],
                 preferred_element_type=jnp.float32)
    h2 = jnp.maximum(h2 + b2_ref[...], 0.0)                         # (TILE_B, 32) f32

    # Layer 3 collapsed to the 2-class softmax logit difference, emitted as a
    # lane-dense row:  d[0, b] = sum_k w3d[0, k] * h2[b, k]   ->  (1, TILE_B).
    # (dot_general contracts both operands on their last dim, i.e. w3d @ h2^T,
    #  so there is no in-kernel transpose, no concat and no (TILE_B, 2) masked
    #  store.)
    d = jax.lax.dot_general(
        w3d_ref[...], h2.astype(jnp.bfloat16),
        dimension_numbers=(((1,), (1,)), ((), ())),
        preferred_element_type=jnp.float32,
    ) + b3d_ref[...]                                                # (1, TILE_B) f32

    # Stable 2-class softmax: p1 = sigmoid(d).  Clamp keeps exp finite even for
    # garbage rows of a padded final tile; exact reciprocal keeps p1 in (0, 1).
    d = jnp.clip(d, -30.0, 30.0)
    p1 = 1.0 / (1.0 + jnp.exp(-d))
    o_ref[...] = p1.astype(o_ref.dtype)


def mlp_forward(x, params, *, max_tile_b=8192):
    """x: (B, 102) float. params: dict of weights/biases. Returns (B, 2) f32 softmax."""
    B, f_in = x.shape
    assert f_in == 102

    # Stream x and weights as bf16 (halves the dominant HBM traffic); biases f32.
    x = x.astype(jnp.bfloat16)
    w1 = params["w1"].astype(jnp.bfloat16)
    w2 = params["w2"].astype(jnp.bfloat16)
    b1 = params["b1"].reshape(1, 64).astype(jnp.float32)
    b2 = params["b2"].reshape(1, 32).astype(jnp.float32)
    # Fold layer 3 + 2-class softmax into the logit difference (class1 - class0).
    w3 = params["w3"].astype(jnp.float32)
    b3 = params["b3"].reshape(1, 2).astype(jnp.float32)
    w3d = (w3[:, 1] - w3[:, 0]).reshape(1, 32).astype(jnp.bfloat16)   # (1, 32) bf16
    b3d = (b3[:, 1] - b3[:, 0]).reshape(1, 1)                          # (1, 1) f32

    # Batch tile: large (multiple of 128) to amortize per-step grid overhead; the
    # whole batch if it is small (block == full dim is always layout-legal).
    # Generation notes: v5e -> 4096 fits the default 16 MiB scoped VMEM (we raise
    # the limit to 32 MiB below so 8192 also works); v7x -> up to 16384 but keep
    # cdiv(B, tile_b) >= 4 so the "parallel" axis still shards over both TCs.
    tile_b = B if B <= max_tile_b else max_tile_b
    num_tiles = pl.cdiv(B, tile_b)

    def const_spec(shape):
        # Resident operand: same block every grid step -> stays in VMEM, no re-DMA.
        return pl.BlockSpec(shape, lambda i: (0, 0))

    # Lane-dense output: one (1, tile_b) f32 row of p1 per grid step.
    p1_tiles = pl.pallas_call(
        mlp_kernel,
        out_shape=jax.ShapeDtypeStruct((num_tiles, tile_b), jnp.float32),
        grid=(num_tiles,),
        in_specs=[
            # x streamed over batch; last dim kept at 102 (== full dim, legal) to
            # avoid 25% extra HBM traffic.  (A/B against pre-padding to 128 on v7x
            # if the 204-B rows underperform the HBM roofline.)
            pl.BlockSpec((tile_b, 102), lambda i: (i, 0)),
            const_spec((102, 64)), const_spec((1, 64)),     # w1, b1 (resident)
            const_spec((64, 32)),  const_spec((1, 32)),     # w2, b2
            const_spec((1, 32)),   const_spec((1, 1)),      # w3 diff, b3 diff
        ],
        out_specs=pl.BlockSpec((1, tile_b), lambda i: (i, 0)),
        compiler_params=pltpu.CompilerParams(
            dimension_semantics=("parallel",),              # v7x: shard batch over 2 TCs
            vmem_limit_bytes=32 * 1024 * 1024,              # cover v5e's 16 MiB default
        ),
    )(x, w1, b1, w2, b2, w3d, b3d)

    # Rebuild the full 2-class softmax in the wrapper (tiny (B, 2) epilogue).
    p1 = p1_tiles.reshape(num_tiles * tile_b)[:B]
    return jnp.stack([1.0 - p1, p1], axis=-1)


def init_params(key):
    """Deterministic init matching the nn.Linear shapes in MLP.__init__ (stored as (in, out))."""
    ks = jax.random.split(key, 6)

    def linear(kw, kb, fan_in, fan_out):
        bound = 1.0 / jnp.sqrt(float(fan_in))
        w = jax.random.uniform(kw, (fan_in, fan_out), jnp.float32, -bound, bound)
        b = jax.random.uniform(kb, (1, fan_out), jnp.float32, -bound, bound)
        return w, b

    w1, b1 = linear(ks[0], ks[1], 102, 64)
    w2, b2 = linear(ks[2], ks[3], 64, 32)
    w3, b3 = linear(ks[4], ks[5], 32, 2)
    return {"w1": w1, "b1": b1, "w2": w2, "b2": b2, "w3": w3, "b3": b3}


def mlp_reference(x, p):
    """Pure-JAX reference at the kernel's quantization points (bf16 operands, f32 math)."""
    bf = lambda a: a.astype(jnp.bfloat16).astype(jnp.float32)
    h1 = jnp.maximum(bf(x) @ bf(p["w1"]) + p["b1"], 0.0)
    h2 = jnp.maximum(bf(h1) @ bf(p["w2"]) + p["b2"], 0.0)
    logits = bf(h2) @ bf(p["w3"]) + p["b3"]
    return jax.nn.softmax(logits, axis=-1)


if __name__ == "__main__":
    key = jax.random.PRNGKey(0)
    kx, kp = jax.random.split(key)

    B = 8
    x = jax.random.normal(kx, (B, 102), dtype=jnp.float32)
    params = init_params(kp)

    out = jax.block_until_ready(mlp_forward(x, params))
    ref = mlp_reference(x, params)

    assert out.shape == (B, 2)
    assert bool(jnp.all(jnp.isfinite(out)))
    assert jnp.allclose(out, ref, atol=2e-3, rtol=2e-3), "mismatch vs reference"
    assert jnp.allclose(jnp.sum(out, axis=-1), 1.0, atol=1e-3), "softmax rows must sum to 1"

    print("KERNEL_OK")
</pallas_src>

<mosaic_0001>
module attributes {stable_mosaic.version = 11 : i64} {
  func.func @mlp_kernel(%arg0: i32, %arg1: memref<8x102xbf16, #tpu.memory_space<vmem>>, %arg2: memref<102x64xbf16, #tpu.memory_space<vmem>>, %arg3: memref<1x64xf32, #tpu.memory_space<vmem>>, %arg4: memref<64x32xbf16, #tpu.memory_space<vmem>>, %arg5: memref<1x32xf32, #tpu.memory_space<vmem>>, %arg6: memref<1x32xbf16, #tpu.memory_space<vmem>>, %arg7: memref<1x1xf32, #tpu.memory_space<vmem>>, %arg8: memref<1x8xf32, #tpu.memory_space<vmem>>) attributes {dimension_semantics = [#tpu.dimension_semantics<parallel>], iteration_bounds = array<i64: 1>, scalar_prefetch = 0 : i64, scratch_operands = 0 : i64, tpu.core_type = #tpu.core_type<tc>, window_params = [{transform_indices = @transform_0, window_bounds = array<i64: 8, 102>}, {pipeline_mode = #tpu.pipeline_mode<synchronous>, transform_indices = @transform_1, window_bounds = array<i64: 102, 64>}, {pipeline_mode = #tpu.pipeline_mode<synchronous>, transform_indices = @transform_2, window_bounds = array<i64: 1, 64>}, {pipeline_mode = #tpu.pipeline_mode<synchronous>, transform_indices = @transform_3, window_bounds = array<i64: 64, 32>}, {pipeline_mode = #tpu.pipeline_mode<synchronous>, transform_indices = @transform_4, window_bounds = array<i64: 1, 32>}, {pipeline_mode = #tpu.pipeline_mode<synchronous>, transform_indices = @transform_5, window_bounds = array<i64: 1, 32>}, {pipeline_mode = #tpu.pipeline_mode<synchronous>, transform_indices = @transform_6, window_bounds = array<i64: 1, 1>}, {transform_indices = @transform_7, window_bounds = array<i64: 1, 8>}]} {
    %c0 = arith.constant 0 : index
    %c0_0 = arith.constant 0 : index
    %0 = vector.load %arg1[%c0, %c0_0] : memref<8x102xbf16, #tpu.memory_space<vmem>>, vector<8x102xbf16>
    %c0_1 = arith.constant 0 : index
    %c0_2 = arith.constant 0 : index
    %1 = vector.load %arg2[%c0_1, %c0_2] : memref<102x64xbf16, #tpu.memory_space<vmem>>, vector<102x64xbf16>
    %cst = arith.constant dense<0.000000e+00> : vector<8x64xf32>
    %2 = tpu.matmul %0, %1, %cst {dimension_numbers = #tpu.dot_dimension_numbers<[1], [0], [0], [1], [0, 0, 1, 1], [], []>} : vector<8x102xbf16>, vector<102x64xbf16>, vector<8x64xf32> -> vector<8x64xf32>
    %c0_3 = arith.constant 0 : index
    %c0_4 = arith.constant 0 : index
    %3 = vector.load %arg3[%c0_3, %c0_4] : memref<1x64xf32, #tpu.memory_space<vmem>>, vector<1x64xf32>
    %4 = vector.broadcast %3 : vector<1x64xf32> to vector<8x64xf32>
    %5 = arith.addf %2, %4 : vector<8x64xf32>
    %cst_5 = arith.constant 0.000000e+00 : f32
    %6 = vector.broadcast %cst_5 : f32 to vector<8x64xf32>
    %7 = arith.maximumf %5, %6 : vector<8x64xf32>
    %8 = arith.truncf %7 : vector<8x64xf32> to vector<8x64xbf16>
    %c0_6 = arith.constant 0 : index
    %c0_7 = arith.constant 0 : index
    %9 = vector.load %arg4[%c0_6, %c0_7] : memref<64x32xbf16, #tpu.memory_space<vmem>>, vector<64x32xbf16>
    %cst_8 = arith.constant dense<0.000000e+00> : vector<8x32xf32>
    %10 = tpu.matmul %8, %9, %cst_8 {dimension_numbers = #tpu.dot_dimension_numbers<[1], [0], [0], [1], [0, 0, 1, 1], [], []>} : vector<8x64xbf16>, vector<64x32xbf16>, vector<8x32xf32> -> vector<8x32xf32>
    %c0_9 = arith.constant 0 : index
    %c0_10 = arith.constant 0 : index
    %11 = vector.load %arg5[%c0_9, %c0_10] : memref<1x32xf32, #tpu.memory_space<vmem>>, vector<1x32xf32>
    %12 = vector.broadcast %11 : vector<1x32xf32> to vector<8x32xf32>
    %13 = arith.addf %10, %12 : vector<8x32xf32>
    %cst_11 = arith.constant 0.000000e+00 : f32
    %14 = vector.broadcast %cst_11 : f32 to vector<8x32xf32>
    %15 = arith.maximumf %13, %14 : vector<8x32xf32>
    %c0_12 = arith.constant 0 : index
    %c0_13 = arith.constant 0 : index
    %16 = vector.load %arg6[%c0_12, %c0_13] : memref<1x32xbf16, #tpu.memory_space<vmem>>, vector<1x32xbf16>
    %17 = arith.truncf %15 : vector<8x32xf32> to vector<8x32xbf16>
    %cst_14 = arith.constant dense<0.000000e+00> : vector<1x8xf32>
    %18 = tpu.matmul %16, %17, %cst_14 {dimension_numbers = #tpu.dot_dimension_numbers<[1], [1], [0], [0], [0, 0, 1, 0], [], []>} : vector<1x32xbf16>, vector<8x32xbf16>, vector<1x8xf32> -> vector<1x8xf32>
    %c0_15 = arith.constant 0 : index
    %c0_16 = arith.constant 0 : index
    %19 = vector.load %arg7[%c0_15, %c0_16] : memref<1x1xf32, #tpu.memory_space<vmem>>, vector<1x1xf32>
    %20 = vector.broadcast %19 : vector<1x1xf32> to vector<1x8xf32>
    %21 = arith.addf %18, %20 : vector<1x8xf32>
    %cst_17 = arith.constant -3.000000e+01 : f32
    %cst_18 = arith.constant 3.000000e+01 : f32
    %22 = vector.broadcast %cst_17 : f32 to vector<1x8xf32>
    %23 = arith.maximumf %22, %21 : vector<1x8xf32>
    %24 = vector.broadcast %cst_18 : f32 to vector<1x8xf32>
    %25 = arith.minimumf %24, %23 : vector<1x8xf32>
    %cst_19 = arith.constant 0.000000e+00 : f32
    %26 = vector.broadcast %cst_19 : f32 to vector<1x8xf32>
    %27 = arith.subf %26, %25 : vector<1x8xf32>
    %28 = math.exp %27 : vector<1x8xf32>
    %cst_20 = arith.constant 1.000000e+00 : f32
    %29 = vector.broadcast %cst_20 : f32 to vector<1x8xf32>
    %30 = arith.addf %29, %28 : vector<1x8xf32>
    %cst_21 = arith.constant 1.000000e+00 : f32
    %31 = vector.broadcast %cst_21 : f32 to vector<1x8xf32>
    %32 = arith.divf %31, %30 : vector<1x8xf32>
    %c0_22 = arith.constant 0 : index
    %c0_23 = arith.constant 0 : index
    %33 = vector.load %arg8[%c0_22, %c0_23] : memref<1x8xf32, #tpu.memory_space<vmem>>, vector<1x8xf32>
    tpu.vector_store %arg8[%c0_22, %c0_23], %32 {strides = array<i32>} : memref<1x8xf32, #tpu.memory_space<vmem>>, vector<1x8xf32>,
    return
  }
  func.func @transform_0(%arg0: i32) -> (i32, i32) {
    %c0_i32 = arith.constant 0 : i32
    %c0_i32_0 = arith.constant 0 : i32
    return %arg0, %c0_i32 : i32, i32
  }
  func.func @transform_1(%arg0: i32) -> (i32, i32) {
    %c0_i32 = arith.constant 0 : i32
    %c0_i32_0 = arith.constant 0 : i32
    %c0_i32_1 = arith.constant 0 : i32
    return %c0_i32, %c0_i32_0 : i32, i32
  }
  func.func @transform_2(%arg0: i32) -> (i32, i32) {
    %c0_i32 = arith.constant 0 : i32
    %c0_i32_0 = arith.constant 0 : i32
    %c0_i32_1 = arith.constant 0 : i32
    return %c0_i32, %c0_i32_0 : i32, i32
  }
  func.func @transform_3(%arg0: i32) -> (i32, i32) {
    %c0_i32 = arith.constant 0 : i32
    %c0_i32_0 = arith.constant 0 : i32
    %c0_i32_1 = arith.constant 0 : i32
    return %c0_i32, %c0_i32_0 : i32, i32
  }
  func.func @transform_4(%arg0: i32) -> (i32, i32) {
    %c0_i32 = arith.constant 0 : i32
    %c0_i32_0 = arith.constant 0 : i32
    %c0_i32_1 = arith.constant 0 : i32
    return %c0_i32, %c0_i32_0 : i32, i32
  }
  func.func @transform_5(%arg0: i32) -> (i32, i32) {
    %c0_i32 = arith.constant 0 : i32
    %c0_i32_0 = arith.constant 0 : i32
    %c0_i32_1 = arith.constant 0 : i32
    return %c0_i32, %c0_i32_0 : i32, i32
  }
  func.func @transform_6(%arg0: i32) -> (i32, i32) {
    %c0_i32 = arith.constant 0 : i32
    %c0_i32_0 = arith.constant 0 : i32
    %c0_i32_1 = arith.constant 0 : i32
    return %c0_i32, %c0_i32_0 : i32, i32
  }
  func.func @transform_7(%arg0: i32) -> (i32, i32) {
    %c0_i32 = arith.constant 0 : i32
    %c0_i32_0 = arith.constant 0 : i32
    return %arg0, %c0_i32 : i32, i32
  }
}

</mosaic_0001>

<llo_original>
// kernel: tpu_custom_call.1
$region0: #{tpu_custom_call.1}
  #allocation0 [shape = 'u32[]', space=smem, size = 0x4, offset = 0x4, fixed_abs, tag = 'smem constant byte address 0x4 - core index']
  #allocation1 [shape = 'u32[72,128]{1,0:T(1,128)}', space=vmem, size = 0x9000, scoped, tag = 'internal scratch']
  #allocation2 [shape = 'f32[1,1]{1,0:T(1,128)S(1)}', space=vmem, size = 0x200, scoped, tag = 'scoped memory for tpu_custom_call.1']
  %s0 = inlined_call_operand.vmem [shape: bf16[8,102], index: 0, kind: input, shape index: {}]
  %s1 = inlined_call_operand.vmem [shape: bf16[102,64], index: 1, kind: input, shape index: {}]
  %s2 = inlined_call_operand.vmem [shape: f32[1,64], index: 2, kind: input, shape index: {}]
  %s3 = inlined_call_operand.vmem [shape: bf16[64,32], index: 3, kind: input, shape index: {}]
  %s4 = inlined_call_operand.vmem [shape: f32[1,32], index: 4, kind: input, shape index: {}]
  %s5 = inlined_call_operand.vmem [shape: bf16[1,32], index: 5, kind: input, shape index: {}]
  %s6 = inlined_call_operand.<no memory space> [shape: f32[1,1], index: 6, kind: input, shape index: {}]
  %s7 = inlined_call_operand.hbm [shape: f32[1,8], index: 7, kind: output, shape index: {}]
  %s8 = sld [smem:[#allocation0]]
  $region38: #{tpu_custom_call.1} parent=0
    _
  %s10 = ssub.s32 1, %s8
  %s11 = scalar_select 0, %s10, %s8
  %v12 = vstv %s6
  %13 = vst [vmem:[#allocation2] sm:$0x1] %v12
  $region1: #{tpu_custom_call.1} parent=0
    #allocation3 [shape = 'u8[512]{0}', space=vmem, size = 0x400, scoped, tag = 'output window, operand 0, single buffered']
    #allocation4 [shape = 's32[1]{0}', space=sflag, size = 0x4, scoped, tag = 'scoped memory for tpu_custom_call.1']
    %14 = vsyncpa [#allocation4], 0
    // Predicated region
    $region2: #{tpu_custom_call.1} parent=1 // pred_check
      _
    $region3: #{tpu_custom_call.1} parent=1 // pred_check_branch
      %16 = sbr.rel (0) target = $region5
    $region4: #{tpu_custom_call.1} parent=1 // pred_region
      _
    $region5: #{tpu_custom_call.1} parent=1 // pred_fallthru
      _
    // Predicated region
    $region6: #{tpu_custom_call.1} parent=1 // pred_check
      _
    $region7: #{tpu_custom_call.1} parent=1 // pred_check_branch
      %18 = sbr.rel (0) target = $region9
    $region8: #{tpu_custom_call.1} parent=1 // pred_region
      _
    $region9: #{tpu_custom_call.1} parent=1 // pred_fallthru
      _
    // Predicated region
    $region10: #{tpu_custom_call.1} parent=1 // pred_check
      _
    $region11: #{tpu_custom_call.1} parent=1 // pred_check_branch
      %20 = sbr.rel (0) target = $region13
    $region12: #{tpu_custom_call.1} parent=1 // pred_region
      _
    $region13: #{tpu_custom_call.1} parent=1 // pred_fallthru
      _
    // Predicated region
    $region14: #{tpu_custom_call.1} parent=1 // pred_check
      _
    $region15: #{tpu_custom_call.1} parent=1 // pred_check_branch
      %22 = sbr.rel (0) target = $region17
    $region16: #{tpu_custom_call.1} parent=1 // pred_region
      _
    $region17: #{tpu_custom_call.1} parent=1 // pred_fallthru
      _
    // Predicated region
    $region18: #{tpu_custom_call.1} parent=1 // pred_check
      _
    $region19: #{tpu_custom_call.1} parent=1 // pred_check_branch
      %24 = sbr.rel (0) target = $region21
    $region20: #{tpu_custom_call.1} parent=1 // pred_region
      _
    $region21: #{tpu_custom_call.1} parent=1 // pred_fallthru
      _
    // Predicated region
    $region22: #{tpu_custom_call.1} parent=1 // pred_check
      _
    $region23: #{tpu_custom_call.1} parent=1 // pred_check_branch
      %26 = sbr.rel (0) target = $region25
    $region24: #{tpu_custom_call.1} parent=1 // pred_region
      _
    $region25: #{tpu_custom_call.1} parent=1 // pred_fallthru
      _
    // Predicated region
    $region26: #{tpu_custom_call.1} parent=1 // pred_check
      _
    $region27: #{tpu_custom_call.1} parent=1 // pred_check_branch
      %28 = sbr.rel (0) target = $region29
    $region28: #{tpu_custom_call.1} parent=1 // pred_region
      _
    $region29: #{tpu_custom_call.1} parent=1 // pred_fallthru
      _
    %v30 = vld [vmem:[%s0] sm:$0xf]
    %v31 = vld [vmem:[%s1] sm:$0xf]
    %v32 = vld [vmem:[%s1 + $0x4] sm:$0xf]
    %v33 = vld [vmem:[%s1 + $0x8] sm:$0xf]
    %v34 = vld [vmem:[%s1 + $0xc] sm:$0xf]
    %v35 = vld [vmem:[%s1 + $0x10] sm:$0xf]
    %v36 = vld [vmem:[%s1 + $0x14] sm:$0xf]
    %v37 = vld [vmem:[%s1 + $0x18] sm:$0xf]
    %v38 = vld [vmem:[%s1 + $0x1c] sm:$0xf]
    %v39 = vld [vmem:[%s1 + $0x20] sm:$0xf]
    %v40 = vld [vmem:[%s1 + $0x24] sm:$0xf]
    %v41 = vld [vmem:[%s1 + $0x28] sm:$0xf]
    %v42 = vld [vmem:[%s1 + $0x2c] sm:$0xf]
    %v43 = vld [vmem:[%s1 + $0x30] sm:$0x7]
    %v44 = vld [vmem:[%s2] sm:$0x1]
    %v46 = vperm.slane %v44, 0
    %v61 = vunpack.c.l.b16 %v31
    %v62 = vunpack.c.l.b16 %v32
    %v63 = vunpack.c.l.b16 %v33
    %v64 = vunpack.c.l.b16 %v34
    %v65 = vunpack.c.l.b16 %v35
    %v66 = vunpack.c.l.b16 %v36
    %v67 = vunpack.c.l.b16 %v37
    %v68 = vunpack.c.l.b16 %v38
    %v69 = vunpack.c.l.b16 %v39
    %v70 = vunpack.c.l.b16 %v40
    %v71 = vunpack.c.l.b16 %v41
    %v72 = vunpack.c.l.b16 %v42
    %v73 = vunpack.c.l.b16 %v43
    %v74 = vpack.c.b16 %v62, %v61
    %v75 = vpack.c.b16 %v64, %v63
    %v76 = vpack.c.b16 %v66, %v65
    %v77 = vpack.c.b16 %v68, %v67
    %v78 = vpack.c.b16 %v70, %v69
    %v79 = vpack.c.b16 %v72, %v71
    %v80 = vpack.c.b16 %v73, %v73
    %vm87 = vcmask 834560
    %v89 = vsel %vm87, %v30, 0
    %vm91 = vcmask 1042432
    %v93 = vsel %vm91, %v80, 0
    %95 = vmatpush.bf16.msra.mxu0 0
    %96 = vmatpush.bf16.msra.mxu0 %v93
    %97 = vmatpush.bf16.msra.mxu0 %v79
    %98 = vmatpush.bf16.msra.mxu0 %v78
    %99 = vmatpush.bf16.msra.mxu0 %v77
    %100 = vmatpush.bf16.msra.mxu0 %v76
    %101 = vmatpush.bf16.msra.mxu0 %v75
    %102 = vmatpush.bf16.msra.mxu0 %v74
    %103 = vmatmul.bf16.gmra.mxu0 %v89
    %v104 = vpop.f32.mrf.mxu0
    %v105 = vadd.f32 %v46, %v104
    %v106 = vpop.f32.mrf.mxu0
    %107 = vdwg.mxu0
    %v108 = vmax.f32 %v105, 0.0
    %v109 = vpack.c.bf16 %v108, %v108
    %v110 = vld [vmem:[%s3] sm:$0xf]
    %v111 = vld [vmem:[%s3 + $0x4] sm:$0xf]
    %v112 = vld [vmem:[%s3 + $0x8] sm:$0xf]
    %v113 = vld [vmem:[%s3 + $0xc] sm:$0xf]
    %v114 = vld [vmem:[%s3 + $0x10] sm:$0xf]
    %v115 = vld [vmem:[%s3 + $0x14] sm:$0xf]
    %v116 = vld [vmem:[%s3 + $0x18] sm:$0xf]
    %v117 = vld [vmem:[%s3 + $0x1c] sm:$0xf]
    %v118 = vld [vmem:[%s4] sm:$0x1]
    %v120 = vperm.slane %v118, 0
    %v130 = vunpack.c.l.b16 %v110
    %v131 = vunpack.c.l.b16 %v111
    %v132 = vunpack.c.l.b16 %v112
    %v133 = vunpack.c.l.b16 %v113
    %v134 = vunpack.c.l.b16 %v114
    %v135 = vunpack.c.l.b16 %v115
    %v136 = vunpack.c.l.b16 %v116
    %v137 = vunpack.c.l.b16 %v117
    %v138 = vpack.c.b16 %v131, %v130
    %v139 = vpack.c.b16 %v133, %v132
    %v140 = vpack.c.b16 %v135, %v134
    %v141 = vpack.c.b16 %v137, %v136
    %vm146 = vcmask 523264
    %v148 = vsel %vm146, %v109, 0
    %150 = vmatpush.bf16.msra.mxu0 0
    %151 = vmatpush.bf16.msra.mxu0 0
    %152 = vmatpush.bf16.msra.mxu0 0
    %153 = vmatpush.bf16.msra.mxu0 0
    %154 = vmatpush.bf16.msra.mxu0 %v141
    %155 = vmatpush.bf16.msra.mxu0 %v140
    %156 = vmatpush.bf16.msra.mxu0 %v139
    %157 = vmatpush.bf16.msra.mxu0 %v138
    %158 = vmatmul.bf16.gmra.mxu0 %v148
    %v159 = vpop.f32.mrf.mxu0
    %v160 = vadd.f32 %v120, %v159
    %v161 = vpop.f32.mrf.mxu0
    %162 = vdwg.mxu0
    %v163 = vmax.f32 %v160, 0.0
    %v164 = vld [vmem:[%s5] sm:$0x1]
    %v165 = vpack.c.bf16 %v163, %v163
    %v166 = vld [vmem:[#allocation2] sm:$0x1]
    %168 = vset.pattern.permute.xlu0 0
    %169 = vperm.xlu0 %168, %v166
    %v170 = vpop.permute.xlu0 %169
    %v172 = vperm.slane %v170, 0
    %vm173 = vcmask 261120
    %v175 = vsel %vm173, %v164, 0
    %v178 = vsel %vm173, %v165, 0
    %180 = vmatpush.bf16.xpose.msra.mxu0 0
    %181 = vmatpush.bf16.xpose.msra.mxu0 0
    %182 = vmatpush.bf16.xpose.msra.mxu0 0
    %183 = vmatpush.bf16.xpose.msra.mxu0 0
    %184 = vmatpush.bf16.xpose.msra.mxu0 0
    %185 = vmatpush.bf16.xpose.msra.mxu0 0
    %186 = vmatpush.bf16.xpose.msra.mxu0 0
    %187 = vmatpush.bf16.xpose.msra.mxu0 %v178
    %188 = vmatmul.bf16.gmra.mxu0 %v175
    %v189 = vpop.f32.mrf.mxu0
    %v190 = vadd.f32 %v172, %v189
    %v191 = vpop.f32.mrf.mxu0
    %192 = vdwg.mxu0
    %v193 = vmax.f32 %v190, -30.0
    %v194 = vmin.f32 %v193, 30.0
    %v195 = vsub.f32 0.0, %v194
    %v196 = vmul.f32 %v195, 1.442695
    %v197 = vpow.pop %v196
    %v198 = vadd.f32 %v197, 1.0
    %v199 = vrcp.pop %v198
    %v200 = vmul.f32 %v198, %v199
    %v201 = vsub.f32 1.0, %v200
    %v202 = vmul.f32 %v199, %v201
    %v203 = vadd.f32 %v199, %v202
    %vm204 = vweird.f32 %v198
    %vm205 = vweird.f32 %v199
    %vm206 = vmor %vm204, %vm205
    %v207 = vsel %vm206, %v199, %v203
    %v208 = vand.u32 2147483647, %v198
    %vm209 = vcmp.eq.f32.partialorder %v208, 8.507059e+37
    %v210 = vand.u32 %v198, 2147483648
    %v211 = vor.u32 1.1754944e-38, %v210
    %v212 = vsel %vm209, %v211, %v207
    %v213 = vmul.f32 1.0, %v212
    %vm214 = vcmask 57344
    %215 = vst.msk [vmem:[#allocation3] sm:$0x1] %vm214, %v213
    // Predicated region
    $region30: #{tpu_custom_call.1} parent=1 // pred_check
      _
    $region31: #{tpu_custom_call.1} parent=1 // pred_check_branch
      %217 = sbr.rel (0) target = $region33
    $region32: #{tpu_custom_call.1} parent=1 // pred_region
      %219 = vsyncadd [#allocation4], 0
      %s221 = sshll.u32 [#allocation3], 4
      %s222 = int_to_ptr.vmem [resolvable:$true] %s221
      %s223 = sshll.u32 %s7, 4
      %s224 = int_to_ptr.hbm [resolvable:$true] %s223
      %226 = dma.vmem_to_hbm [thread:$0]  %s222, 16, %s224, [#allocation4]
    $region33: #{tpu_custom_call.1} parent=1 // pred_fallthru
      _
    // Predicated region
    $region34: #{tpu_custom_call.1} parent=1 // pred_check
      _
    $region35: #{tpu_custom_call.1} parent=1 // pred_check_branch
      %228 = sbr.rel (0) target = $region37
    $region36: #{tpu_custom_call.1} parent=1 // pred_region
      %230 = dma.done [#allocation4], 16
    $region37: #{tpu_custom_call.1} parent=1 // pred_fallthru
      _
    %231 = vsyncpa [#allocation4], 1

</llo_original>
